<compile_context>
chip_gen: v5e
topology: v5e:2x2
jax: 0.10.0
libtpu: 0.0.40
codegen_flags: <defaults>
</compile_context>

<pallas_src>
import functools
import math

import jax
import jax.numpy as jnp
from jax import lax
from jax.experimental import pallas as pl
from jax.experimental.pallas import tpu as pltpu

ALPHA = 1.0
BETA = 0.1
GAMMA = 0.01

_LANE = 128
_SUBLANE = 8
_TARGET_TILE_BYTES = 2 * 1024 * 1024       # ~2 MiB per streamed input per grid step
_VMEM_LIMIT_BYTES = 48 * 1024 * 1024       # < v7x 64 MiB physical, fine on v5e/v6e (128 MiB)
_LATENT_VMEM_MAX_BYTES = 4 * 1024 * 1024   # larger latents are reduced in the wrapper
_NUM_CORE_SPLIT = 2                        # engages both TensorCores on v7x


def _mse_stream_kernel(n_rows, tiles_per_core, needs_mask, with_latent, *refs):
    """Streams squared differences into per-core (8, C) partial-sum output blocks."""
    if with_latent:
        orig_ref, recon_ref, lat_ref, acc_ref, lat_out_ref = refs
    else:
        orig_ref, recon_ref, acc_ref = refs
        lat_ref = lat_out_ref = None

    p = pl.program_id(0)              # core-split axis ("parallel")
    k = pl.program_id(1)              # streamed row-tile axis ("arbitrary")
    k_last = pl.num_programs(1) - 1

    @pl.when(k == 0)
    def _init():
        acc_ref[...] = jnp.zeros_like(acc_ref)
        if with_latent:
            lat_out_ref[...] = jnp.zeros_like(lat_out_ref)

    # ---- hot loop: native-dtype tiles in HBM/VMEM, per-tile f32 upcast, VPU-only fold ----
    o = orig_ref[...].astype(jnp.float32)
    r = recon_ref[...].astype(jnp.float32)
    d = r - o
    sq = d * d                                            # (tile_rows, C) f32
    tile_rows, c = sq.shape
    if needs_mask:
        # Zero the ragged row tail / clamped duplicate visits instead of padding in HBM.
        row0 = (p * tiles_per_core + k) * tile_rows
        rows = lax.broadcasted_iota(jnp.int32, sq.shape, 0) + row0
        sq = jnp.where(rows < n_rows, sq, 0.0)
    # Fold tile rows into the (8, C) accumulator with cross-vreg VPU adds only;
    # the reshape preserves the trailing (8, C) tile so no VMEM copy is materialized.
    acc_ref[...] += jnp.sum(sq.reshape(tile_rows // _SUBLANE, _SUBLANE, c), axis=0)

    # ---- tiny latent terms: computed once, by the p==0 slice, on its last step ----
    if with_latent:
        @pl.when(jnp.logical_and(p == 0, k == k_last))
        def _latent():
            lat = lat_ref[...].astype(jnp.float32)                     # (B, H) resident in VMEM
            norm_sum = jnp.sum(jnp.sqrt(jnp.sum(lat * lat, axis=1, keepdims=True)))
            abs_sum = jnp.sum(jnp.abs(lat))
            sub = lax.broadcasted_iota(jnp.int32, (_SUBLANE, _LANE), 0)
            lane = lax.broadcasted_iota(jnp.int32, (_SUBLANE, _LANE), 1)
            lat_out_ref[...] = (
                jnp.where(jnp.logical_and(sub == 0, lane == 0), norm_sum, 0.0)
                + jnp.where(jnp.logical_and(sub == 0, lane == 1), abs_sum, 0.0))


def reconstruction_loss(original, reconstructed, latent_repr,
                        alpha=ALPHA, beta=BETA, gamma=GAMMA,
                        target_tile_bytes=_TARGET_TILE_BYTES,
                        vmem_limit_bytes=_VMEM_LIMIT_BYTES,
                        latent_vmem_max_bytes=_LATENT_VMEM_MAX_BYTES):
    """Pallas TPU ReconstructionLoss.forward.

    original/reconstructed: same shape, any float dtype (kept native, never padded).
    latent_repr: (B, H); torch.norm(dim=1) reduces over H.
    Returns (total_loss, {'reconstruction', 'latent_reg', 'sparsity_reg'}) as f32 scalars.
    """
    assert original.shape == reconstructed.shape, "original/reconstructed must match"
    assert latent_repr.ndim == 2, "latent_repr must be (batch, hidden)"

    n_total = max(1, math.prod(original.shape))
    b_lat, h_lat = latent_repr.shape

    # --- layout: collapse leading dims only (minor dim untouched -> no HBM relayout) ---
    if original.ndim >= 2:
        n_cols = original.shape[-1]
        n_rows = max(1, math.prod(original.shape[:-1]))
    else:
        n_cols = original.shape[0] if original.ndim == 1 else 1
        n_rows = 1
    orig2 = original.reshape(n_rows, n_cols)
    recon2 = reconstructed.reshape(n_rows, n_cols)

    # --- tiling: ~target_tile_bytes per streamed input per step, dtype-aware sublane pack ---
    min_item = min(orig2.dtype.itemsize, recon2.dtype.itemsize)
    max_item = max(orig2.dtype.itemsize, recon2.dtype.itemsize)
    pack = max(_SUBLANE, 32 // max(1, min_item))        # 8 f32 / 16 bf16 / 32 int8-fp8
    c_pad = pl.cdiv(n_cols, _LANE) * _LANE              # VMEM lane footprint per row
    tr = (max(1, target_tile_bytes // (c_pad * max_item)) // pack) * pack
    tr = max(pack, tr)
    rows_cap = pl.cdiv(n_rows, pack) * pack
    tr = min(tr, rows_cap)
    num_tiles = pl.cdiv(n_rows, tr)

    split = _NUM_CORE_SPLIT if num_tiles >= 2 else 1
    tiles_per_core = pl.cdiv(num_tiles, split)
    needs_mask = (split * tiles_per_core * tr) != n_rows

    lat_bytes = b_lat * h_lat * latent_repr.dtype.itemsize
    with_latent = lat_bytes <= latent_vmem_max_bytes

    def row_map(p, k):
        # Clamp so every visit is a valid (possibly ragged) block of the real array;
        # duplicate out-of-range visits contribute 0 via the in-kernel mask.
        return (jnp.minimum(p * tiles_per_core + k, num_tiles - 1), 0)

    stream_spec = pl.BlockSpec((tr, n_cols), row_map)
    in_specs = [stream_spec, stream_spec]
    args = [orig2, recon2]

    partial_shape = jax.ShapeDtypeStruct((split, _SUBLANE, n_cols), jnp.float32)
    partial_spec = pl.BlockSpec((None, _SUBLANE, n_cols), lambda p, k: (p, 0, 0))
    if with_latent:
        in_specs.append(pl.BlockSpec(memory_space=pltpu.MemorySpace.VMEM))
        args.append(latent_repr)
        out_shape = (partial_shape,
                     jax.ShapeDtypeStruct((split, _SUBLANE, _LANE), jnp.float32))
        out_specs = (partial_spec,
                     pl.BlockSpec((None, _SUBLANE, _LANE), lambda p, k: (p, 0, 0)))
    else:
        out_shape = partial_shape
        out_specs = partial_spec

    kernel = functools.partial(_mse_stream_kernel, n_rows, tiles_per_core,
                               needs_mask, with_latent)

    outs = pl.pallas_call(
        kernel,
        out_shape=out_shape,
        grid_spec=pltpu.PrefetchScalarGridSpec(
            num_scalar_prefetch=0,
            grid=(split, tiles_per_core),
            in_specs=in_specs,
            out_specs=out_specs,
        ),
        compiler_params=pltpu.CompilerParams(
            dimension_semantics=("parallel", "arbitrary"),
            vmem_limit_bytes=vmem_limit_bytes,
        ),
    )(*args)

    if with_latent:
        partials, lat_out = outs
        latent_norm_sum = lat_out[0, 0, 0]
        latent_abs_sum = lat_out[0, 0, 1]
    else:
        # Latent too large for VMEM residency -> tiny O(B*H) reductions in the wrapper.
        partials = outs
        lat32 = latent_repr.astype(jnp.float32)
        latent_norm_sum = jnp.sum(jnp.sqrt(jnp.sum(lat32 * lat32, axis=1)))
        latent_abs_sum = jnp.sum(jnp.abs(lat32))

    recon_loss = jnp.sum(partials) * (1.0 / float(n_total))
    latent_reg = latent_norm_sum * (1.0 / float(b_lat))
    sparsity_reg = latent_abs_sum * (1.0 / float(b_lat * h_lat))
    total = alpha * recon_loss + beta * latent_reg + gamma * sparsity_reg
    return total, {"reconstruction": recon_loss,
                   "latent_reg": latent_reg,
                   "sparsity_reg": sparsity_reg}


def _reference(original, reconstructed, latent_repr,
               alpha=ALPHA, beta=BETA, gamma=GAMMA):
    o = original.astype(jnp.float32)
    r = reconstructed.astype(jnp.float32)
    lat = latent_repr.astype(jnp.float32)
    recon = jnp.mean((r - o) ** 2)
    latent_reg = jnp.mean(jnp.sqrt(jnp.sum(lat ** 2, axis=1)))
    sparsity = jnp.mean(jnp.abs(lat))
    total = alpha * recon + beta * latent_reg + gamma * sparsity
    return total, (recon, latent_reg, sparsity)


def _check(total, comps, ref, rtol, atol):
    ref_total, (ref_r, ref_l, ref_s) = ref
    assert jnp.allclose(total, ref_total, rtol=rtol, atol=atol), (total, ref_total)
    assert jnp.allclose(comps["reconstruction"], ref_r, rtol=rtol, atol=atol)
    assert jnp.allclose(comps["latent_reg"], ref_l, rtol=rtol, atol=atol)
    assert jnp.allclose(comps["sparsity_reg"], ref_s, rtol=rtol, atol=atol)


if __name__ == "__main__":
    key = jax.random.PRNGKey(0)
    k1, k2, k3 = jax.random.split(key, 3)

    # Case 1: small f32 multivariate-series shapes implied by the module.
    B, T, D, H = 2, 8, 32, 32
    original = jax.random.normal(k1, (B, T, D), dtype=jnp.float32)
    reconstructed = original + 0.1 * jax.random.normal(k2, (B, T, D), dtype=jnp.float32)
    latent_repr = jax.random.normal(k3, (B, H), dtype=jnp.float32)

    total, comps = reconstruction_loss(original, reconstructed, latent_repr)
    total = jax.block_until_ready(total)
    _check(total, comps, _reference(original, reconstructed, latent_repr),
           rtol=1e-5, atol=1e-6)

    # Case 2: multi-tile stream + 2-way core split + ragged/clamped tail + native bf16 inputs.
    B2, T2, D2, H2 = 4, 96, 192, 64
    k4, k5, k6 = jax.random.split(jax.random.PRNGKey(1), 3)
    o2 = jax.random.normal(k4, (B2, T2, D2), dtype=jnp.bfloat16)
    r2 = (o2.astype(jnp.float32)
          + 0.1 * jax.random.normal(k5, (B2, T2, D2), dtype=jnp.float32)).astype(jnp.bfloat16)
    lat2 = jax.random.normal(k6, (B2, H2), dtype=jnp.float32)

    total2, comps2 = reconstruction_loss(o2, r2, lat2, target_tile_bytes=64 * 1024)
    total2 = jax.block_until_ready(total2)
    _check(total2, comps2, _reference(o2, r2, lat2), rtol=1e-4, atol=1e-5)

    # Case 3: force the large-latent fallback (latent reduced in the wrapper).
    total3, comps3 = reconstruction_loss(original, reconstructed, latent_repr,
                                         latent_vmem_max_bytes=0)
    total3 = jax.block_until_ready(total3)
    _check(total3, comps3, _reference(original, reconstructed, latent_repr),
           rtol=1e-5, atol=1e-6)

    print("KERNEL_OK")
</pallas_src>

<mosaic_0001>
module attributes {stable_mosaic.version = 11 : i64} {
  func.func @_mse_stream_kernel(%arg0: i32, %arg1: i32, %arg2: memref<16x32xf32, #tpu.memory_space<vmem>>, %arg3: memref<16x32xf32, #tpu.memory_space<vmem>>, %arg4: memref<2x32xf32, #tpu.memory_space<vmem>>, %arg5: memref<1x8x32xf32, #tpu.memory_space<vmem>>, %arg6: memref<1x8x128xf32, #tpu.memory_space<vmem>>) attributes {dimension_semantics = [#tpu.dimension_semantics<parallel>, #tpu.dimension_semantics<arbitrary>], iteration_bounds = array<i64: 1, 1>, scalar_prefetch = 0 : i64, scratch_operands = 0 : i64, tpu.core_type = #tpu.core_type<tc>, window_params = [{transform_indices = @transform_0, window_bounds = array<i64: 16, 32>}, {transform_indices = @transform_1, window_bounds = array<i64: 16, 32>}, {pipeline_mode = #tpu.pipeline_mode<synchronous>, transform_indices = @transform_2, window_bounds = array<i64: 2, 32>}, {transform_indices = @transform_3, window_bounds = array<i64: 1, 8, 32>}, {transform_indices = @transform_4, window_bounds = array<i64: 1, 8, 128>}]} {
    %c0_i32 = arith.constant 0 : i32
    %0 = arith.cmpi eq, %arg1, %c0_i32 : i32
    %1 = arith.extui %0 : i1 to i32
    %c0_i32_0 = arith.constant 0 : i32
    %2 = arith.cmpi ne, %1, %c0_i32_0 : i32
    scf.if %2 {
      %cst_13 = arith.constant 0.000000e+00 : f32
      %20 = vector.broadcast %cst_13 : f32 to vector<8x32xf32>
      %c0_14 = arith.constant 0 : index
      %c0_15 = arith.constant 0 : index
      %c0_16 = arith.constant 0 : index
      %21 = vector.load %arg5[%c0_14, %c0_15, %c0_16] : memref<1x8x32xf32, #tpu.memory_space<vmem>>, vector<1x8x32xf32>
      %22 = vector.shape_cast %21 : vector<1x8x32xf32> to vector<8x32xf32>
      %23 = vector.shape_cast %20 : vector<8x32xf32> to vector<1x8x32xf32>
      tpu.vector_store %arg5[%c0_14, %c0_15, %c0_16], %23 {strides = array<i32>} : memref<1x8x32xf32, #tpu.memory_space<vmem>>, vector<1x8x32xf32>,
      %cst_17 = arith.constant 0.000000e+00 : f32
      %24 = vector.broadcast %cst_17 : f32 to vector<8x128xf32>
      %c0_18 = arith.constant 0 : index
      %c0_19 = arith.constant 0 : index
      %c0_20 = arith.constant 0 : index
      %25 = vector.load %arg6[%c0_18, %c0_19, %c0_20] : memref<1x8x128xf32, #tpu.memory_space<vmem>>, vector<1x8x128xf32>
      %26 = vector.shape_cast %25 : vector<1x8x128xf32> to vector<8x128xf32>
      %27 = vector.shape_cast %24 : vector<8x128xf32> to vector<1x8x128xf32>
      tpu.vector_store %arg6[%c0_18, %c0_19, %c0_20], %27 {strides = array<i32>} : memref<1x8x128xf32, #tpu.memory_space<vmem>>, vector<1x8x128xf32>,
    } else {
    }
    %c0 = arith.constant 0 : index
    %c0_1 = arith.constant 0 : index
    %3 = vector.load %arg2[%c0, %c0_1] : memref<16x32xf32, #tpu.memory_space<vmem>>, vector<16x32xf32>
    %c0_2 = arith.constant 0 : index
    %c0_3 = arith.constant 0 : index
    %4 = vector.load %arg3[%c0_2, %c0_3] : memref<16x32xf32, #tpu.memory_space<vmem>>, vector<16x32xf32>
    %5 = arith.subf %4, %3 : vector<16x32xf32>
    %6 = arith.mulf %5, %5 : vector<16x32xf32>
    %c0_4 = arith.constant 0 : index
    %c0_5 = arith.constant 0 : index
    %c0_6 = arith.constant 0 : index
    %7 = vector.load %arg5[%c0_4, %c0_5, %c0_6] : memref<1x8x32xf32, #tpu.memory_space<vmem>>, vector<1x8x32xf32>
    %8 = vector.shape_cast %7 : vector<1x8x32xf32> to vector<8x32xf32>
    %9 = vector.shape_cast %6 : vector<16x32xf32> to vector<2x8x32xf32>
    %cst = arith.constant dense<0.000000e+00> : vector<8x32xf32>
    %10 = vector.multi_reduction <add>, %9, %cst [0] : vector<2x8x32xf32> to vector<8x32xf32>
    %11 = arith.addf %8, %10 : vector<8x32xf32>
    %c0_7 = arith.constant 0 : index
    %c0_8 = arith.constant 0 : index
    %c0_9 = arith.constant 0 : index
    %12 = vector.load %arg5[%c0_7, %c0_8, %c0_9] : memref<1x8x32xf32, #tpu.memory_space<vmem>>, vector<1x8x32xf32>
    %13 = vector.shape_cast %12 : vector<1x8x32xf32> to vector<8x32xf32>
    %14 = vector.shape_cast %11 : vector<8x32xf32> to vector<1x8x32xf32>
    tpu.vector_store %arg5[%c0_7, %c0_8, %c0_9], %14 {strides = array<i32>} : memref<1x8x32xf32, #tpu.memory_space<vmem>>, vector<1x8x32xf32>,
    %c0_i32_10 = arith.constant 0 : i32
    %15 = arith.cmpi eq, %arg0, %c0_i32_10 : i32
    %c0_i32_11 = arith.constant 0 : i32
    %16 = arith.cmpi eq, %arg1, %c0_i32_11 : i32
    %17 = arith.andi %15, %16 : i1
    %18 = arith.extui %17 : i1 to i32
    %c0_i32_12 = arith.constant 0 : i32
    %19 = arith.cmpi ne, %18, %c0_i32_12 : i32
    scf.if %19 {
      %c0_13 = arith.constant 0 : index
      %c0_14 = arith.constant 0 : index
      %20 = vector.load %arg4[%c0_13, %c0_14] : memref<2x32xf32, #tpu.memory_space<vmem>>, vector<2x32xf32>
      %21 = arith.mulf %20, %20 : vector<2x32xf32>
      %cst_15 = arith.constant dense<0.000000e+00> : vector<2xf32>
      %22 = vector.multi_reduction <add>, %21, %cst_15 [1] : vector<2x32xf32> to vector<2xf32>
      %23 = vector.shape_cast %22 : vector<2xf32> to vector<2x1xf32>
      %24 = math.sqrt %23 : vector<2x1xf32>
      %25 = vector.shape_cast %24 : vector<2x1xf32> to vector<1x2x1xf32>
      %cst_16 = arith.constant dense<0.000000e+00> : vector<1xf32>
      %26 = vector.multi_reduction <add>, %25, %cst_16 [1, 2] : vector<1x2x1xf32> to vector<1xf32>
      %27 = vector.shape_cast %26 : vector<1xf32> to vector<1x1x1xf32>
      %28 = vector.extract %27[0, 0, 0] : f32 from vector<1x1x1xf32>
      %29 = math.absf %20 : vector<2x32xf32>
      %30 = vector.shape_cast %29 : vector<2x32xf32> to vector<1x2x32xf32>
      %cst_17 = arith.constant dense<0.000000e+00> : vector<1xf32>
      %31 = vector.multi_reduction <add>, %30, %cst_17 [1, 2] : vector<1x2x32xf32> to vector<1xf32>
      %32 = vector.shape_cast %31 : vector<1xf32> to vector<1x1x1xf32>
      %33 = vector.extract %32[0, 0, 0] : f32 from vector<1x1x1xf32>
      %34 = tpu.iota {dimensions = array<i32: 0>} : vector<8x128xi32>
      %35 = tpu.iota {dimensions = array<i32: 1>} : vector<8x128xi32>
      %c0_i32_18 = arith.constant 0 : i32
      %36 = vector.broadcast %c0_i32_18 : i32 to vector<8x128xi32>
      %37 = arith.cmpi eq, %34, %36 : vector<8x128xi32>
      %c0_i32_19 = arith.constant 0 : i32
      %38 = vector.broadcast %c0_i32_19 : i32 to vector<8x128xi32>
      %39 = arith.cmpi eq, %35, %38 : vector<8x128xi32>
      %40 = arith.andi %37, %39 : vector<8x128xi1>
      %cst_20 = arith.constant 0.000000e+00 : f32
      %41 = vector.broadcast %28 : f32 to vector<8x128xf32>
      %42 = vector.broadcast %cst_20 : f32 to vector<8x128xf32>
      %43 = arith.select %40, %41, %42 : vector<8x128xi1>, vector<8x128xf32>
      %c0_i32_21 = arith.constant 0 : i32
      %44 = vector.broadcast %c0_i32_21 : i32 to vector<8x128xi32>
      %45 = arith.cmpi eq, %34, %44 : vector<8x128xi32>
      %c1_i32 = arith.constant 1 : i32
      %46 = vector.broadcast %c1_i32 : i32 to vector<8x128xi32>
      %47 = arith.cmpi eq, %35, %46 : vector<8x128xi32>
      %48 = arith.andi %45, %47 : vector<8x128xi1>
      %cst_22 = arith.constant 0.000000e+00 : f32
      %49 = vector.broadcast %33 : f32 to vector<8x128xf32>
      %50 = vector.broadcast %cst_22 : f32 to vector<8x128xf32>
      %51 = arith.select %48, %49, %50 : vector<8x128xi1>, vector<8x128xf32>
      %52 = arith.addf %43, %51 : vector<8x128xf32>
      %c0_23 = arith.constant 0 : index
      %c0_24 = arith.constant 0 : index
      %c0_25 = arith.constant 0 : index
      %53 = vector.load %arg6[%c0_23, %c0_24, %c0_25] : memref<1x8x128xf32, #tpu.memory_space<vmem>>, vector<1x8x128xf32>
      %54 = vector.shape_cast %53 : vector<1x8x128xf32> to vector<8x128xf32>
      %55 = vector.shape_cast %52 : vector<8x128xf32> to vector<1x8x128xf32>
      tpu.vector_store %arg6[%c0_23, %c0_24, %c0_25], %55 {strides = array<i32>} : memref<1x8x128xf32, #tpu.memory_space<vmem>>, vector<1x8x128xf32>,
    } else {
    }
    return
  }
  func.func @transform_0(%arg0: i32, %arg1: i32) -> (i32, i32) {
    %c1_i32 = arith.constant 1 : i32
    %0 = arith.muli %arg0, %c1_i32 : i32
    %1 = arith.addi %0, %arg1 : i32
    %c0_i32 = arith.constant 0 : i32
    %2 = arith.minsi %1, %c0_i32 : i32
    %c0_i32_0 = arith.constant 0 : i32
    %c0_i32_1 = arith.constant 0 : i32
    return %2, %c0_i32_0 : i32, i32
  }
  func.func @transform_1(%arg0: i32, %arg1: i32) -> (i32, i32) {
    %c1_i32 = arith.constant 1 : i32
    %0 = arith.muli %arg0, %c1_i32 : i32
    %1 = arith.addi %0, %arg1 : i32
    %c0_i32 = arith.constant 0 : i32
    %2 = arith.minsi %1, %c0_i32 : i32
    %c0_i32_0 = arith.constant 0 : i32
    %c0_i32_1 = arith.constant 0 : i32
    return %2, %c0_i32_0 : i32, i32
  }
  func.func @transform_2(%arg0: i32, %arg1: i32) -> (i32, i32) {
    %c0_i32 = arith.constant 0 : i32
    %c0_i32_0 = arith.constant 0 : i32
    %c0_i32_1 = arith.constant 0 : i32
    return %c0_i32, %c0_i32_0 : i32, i32
  }
  func.func @transform_3(%arg0: i32, %arg1: i32) -> (i32, i32, i32) {
    %c0_i32 = arith.constant 0 : i32
    %c0_i32_0 = arith.constant 0 : i32
    %c0_i32_1 = arith.constant 0 : i32
    return %arg0, %c0_i32, %c0_i32_0 : i32, i32, i32
  }
  func.func @transform_4(%arg0: i32, %arg1: i32) -> (i32, i32, i32) {
    %c0_i32 = arith.constant 0 : i32
    %c0_i32_0 = arith.constant 0 : i32
    %c0_i32_1 = arith.constant 0 : i32
    return %arg0, %c0_i32, %c0_i32_0 : i32, i32, i32
  }
}

</mosaic_0001>

<llo_original>
// kernel: tpu_custom_call.1
$region0: #{tpu_custom_call.1}
  #allocation0 [shape = 'u32[]', space=smem, size = 0x4, offset = 0x4, fixed_abs, tag = 'smem constant byte address 0x4 - core index']
  #allocation1 [shape = 'u32[72,128]{1,0:T(1,128)}', space=vmem, size = 0x9000, scoped, tag = 'internal scratch']
  %s0 = inlined_call_operand.hbm [shape: f32[16,32], index: 0, kind: input, shape index: {}]
  %s1 = inlined_call_operand.hbm [shape: f32[16,32], index: 1, kind: input, shape index: {}]
  %s2 = inlined_call_operand.hbm [shape: f32[2,32], index: 2, kind: input, shape index: {}]
  %s3 = inlined_call_operand.hbm [shape: f32[1,8,32], index: 3, kind: output, shape index: {0}]
  %s4 = inlined_call_operand.hbm [shape: f32[1,8,128], index: 4, kind: output, shape index: {1}]
  %5 = xla_tuple %s3, %s4
  %s6 = sld [smem:[#allocation0]]
  $region50: #{tpu_custom_call.1} parent=0
    _
  %s8 = ssub.s32 1, %s6
  %s9 = scalar_select 0, %s8, %s6
  $region1: #{tpu_custom_call.1} parent=0
    #allocation2 [shape = 'u8[8192]{0}', space=vmem, size = 0x2000, scoped, tag = 'input window, operand 0, single buffered']
    #allocation3 [shape = 's32[1]{0}', space=sflag, size = 0x4, scoped, tag = 'scoped memory for tpu_custom_call.1']
    #allocation4 [shape = 's32[1]{0}', space=sflag, size = 0x4, scoped, tag = 'scoped memory for tpu_custom_call.1']
    #allocation5 [shape = 'u8[8192]{0}', space=vmem, size = 0x2000, scoped, tag = 'input window, operand 1, single buffered']
    #allocation6 [shape = 's32[1]{0}', space=sflag, size = 0x4, scoped, tag = 'scoped memory for tpu_custom_call.1']
    #allocation7 [shape = 'u8[1024]{0}', space=vmem, size = 0x400, scoped, tag = 'input window, operand 2, single buffered']
    #allocation8 [shape = 'u8[4096]{0}', space=vmem, size = 0x1000, scoped, tag = 'output window, operand 0, single buffered']
    #allocation9 [shape = 'u8[4096]{0}', space=vmem, size = 0x1000, scoped, tag = 'output window, operand 1, single buffered']
    #allocation10 [shape = 's32[1]{0}', space=sflag, size = 0x4, scoped, tag = 'scoped memory for tpu_custom_call.1']
    %10 = vsyncpa [#allocation3], 0
    %11 = vsyncpa [#allocation6], 0
    %12 = vsyncpa [#allocation4], 0
    %13 = vsyncpa [#allocation10], 0
    // Predicated region
    $region2: #{tpu_custom_call.1} parent=1 // pred_check
      _
    $region3: #{tpu_custom_call.1} parent=1 // pred_check_branch
      %15 = sbr.rel (0) target = $region5
    $region4: #{tpu_custom_call.1} parent=1 // pred_region
      %s16 = sadd.s32 0, 0
      %p17 = scmp.lt.s32.totalorder %s16, 0
      %s18 = scalar_select %p17, %s16, 0
      %s19 = smul.u32 2, %s18
      %21 = vsyncadd [#allocation3], 0
      %s22 = smul.addr %s19, 8
      %s23 = scalar_lea.hbm %s0, %s22
      %s24 = sshll.u32 %s23, 4
      %s25 = int_to_ptr.hbm [resolvable:$true] %s24
      %s26 = sshll.u32 [#allocation2], 4
      %s27 = int_to_ptr.vmem [resolvable:$true] %s26
      %32 = dma.hbm_to_vmem [thread:$0]  %s25, 256, %s27, [#allocation3], 128, 128, 8
    $region5: #{tpu_custom_call.1} parent=1 // pred_fallthru
      _
    // Predicated region
    $region6: #{tpu_custom_call.1} parent=1 // pred_check
      _
    $region7: #{tpu_custom_call.1} parent=1 // pred_check_branch
      %34 = sbr.rel (0) target = $region9
    $region8: #{tpu_custom_call.1} parent=1 // pred_region
      %s35 = sadd.s32 0, 0
      %p36 = scmp.lt.s32.totalorder %s35, 0
      %s37 = scalar_select %p36, %s35, 0
      %s38 = smul.u32 2, %s37
      %40 = vsyncadd [#allocation6], 0
      %s41 = smul.addr %s38, 8
      %s42 = scalar_lea.hbm %s1, %s41
      %s43 = sshll.u32 %s42, 4
      %s44 = int_to_ptr.hbm [resolvable:$true] %s43
      %s45 = sshll.u32 [#allocation5], 4
      %s46 = int_to_ptr.vmem [resolvable:$true] %s45
      %51 = dma.hbm_to_vmem [thread:$0]  %s44, 256, %s46, [#allocation6], 128, 128, 8
    $region9: #{tpu_custom_call.1} parent=1 // pred_fallthru
      _
    // Predicated region
    $region10: #{tpu_custom_call.1} parent=1 // pred_check
      _
    $region11: #{tpu_custom_call.1} parent=1 // pred_check_branch
      %53 = sbr.rel (0) target = $region13
    $region12: #{tpu_custom_call.1} parent=1 // pred_region
      %55 = vsyncadd [#allocation6], 0
      %s57 = sshll.u32 %s2, 4
      %s58 = int_to_ptr.hbm [resolvable:$true] %s57
      %s59 = sshll.u32 [#allocation7], 4
      %s60 = int_to_ptr.vmem [resolvable:$true] %s59
      %62 = dma.hbm_to_vmem [thread:$0]  %s58, 32, %s60, [#allocation6]
    $region13: #{tpu_custom_call.1} parent=1 // pred_fallthru
      _
    // Predicated region
    $region14: #{tpu_custom_call.1} parent=1 // pred_check
      _
    $region15: #{tpu_custom_call.1} parent=1 // pred_check_branch
      %64 = sbr.rel (0) target = $region17
    $region16: #{tpu_custom_call.1} parent=1 // pred_region
      %66 = dma.done [#allocation3], 256
    $region17: #{tpu_custom_call.1} parent=1 // pred_fallthru
      _
    // Predicated region
    $region18: #{tpu_custom_call.1} parent=1 // pred_check
      _
    $region19: #{tpu_custom_call.1} parent=1 // pred_check_branch
      %68 = sbr.rel (0) target = $region21
    $region20: #{tpu_custom_call.1} parent=1 // pred_region
      %70 = dma.done [#allocation6], 256
    $region21: #{tpu_custom_call.1} parent=1 // pred_fallthru
      _
    // Predicated region
    $region22: #{tpu_custom_call.1} parent=1 // pred_check
      _
    $region23: #{tpu_custom_call.1} parent=1 // pred_check_branch
      %72 = sbr.rel (0) target = $region25
    $region24: #{tpu_custom_call.1} parent=1 // pred_region
      %74 = dma.done [#allocation6], 32
    $region25: #{tpu_custom_call.1} parent=1 // pred_fallthru
      _
    %s75 = sadd.s32 0, 0
    %p76 = scmp.lt.s32.totalorder %s75, 0
    %s77 = scalar_select %p76, %s75, 0
    %s78 = smul.u32 2, %s77
    %s79 = sadd.s32 0, 0
    %p80 = scmp.lt.s32.totalorder %s79, 0
    %s81 = scalar_select %p80, %s79, 0
    %s82 = smul.u32 2, %s81
    %p83 = scmp.eq.s32.totalorder 0, 0
    // Predicated region
    $region26: #{tpu_custom_call.1} parent=1 // pred_check
      %p84 = pneg %p83
    $region27: #{tpu_custom_call.1} parent=1 // pred_check_branch
      %86 = sbr.rel (%p84) target = $region29
    $region28: #{tpu_custom_call.1} parent=1 // pred_region
      %vm87 = vcmask 261120
      %88 = vst.msk [vmem:[#allocation8] sm:$0xff] %vm87, 0.0
      %89 = vst [vmem:[#allocation9] sm:$0xff] 0.0
    $region29: #{tpu_custom_call.1} parent=1 // pred_fallthru
      _
    %v90 = vld [vmem:[#allocation2] sm:$0xff]
    %v91 = vld [vmem:[#allocation2 + $0x8] sm:$0xff]
    %v92 = vld [vmem:[#allocation5] sm:$0xff]
    %v93 = vld [vmem:[#allocation5 + $0x8] sm:$0xff]
    %v94 = vsub.f32 %v92, %v90
    %v95 = vsub.f32 %v93, %v91
    %v96 = vmul.f32 %v94, %v94
    %v97 = vmul.f32 %v95, %v95
    %v98 = vld [vmem:[#allocation8] sm:$0xff]
    %vm99 = vcmask 261120
    %v100 = vsel %vm99, %v96, 0.0
    %v101 = vsel %vm99, %v97, 0.0
    %v102 = vadd.f32 %v100, %v101
    %v103 = vadd.f32 %v98, %v102
    %104 = vst.msk [vmem:[#allocation8] sm:$0xff] %vm99, %v103
    %p105 = scmp.eq.s32.totalorder 0, 0
    %p106 = pnand %p105, %p83
    %p107 = pneg %p106
    // Predicated region
    $region30: #{tpu_custom_call.1} parent=1 // pred_check
      _
    $region31: #{tpu_custom_call.1} parent=1 // pred_check_branch
      %109 = sbr.rel (%p106) target = $region33
    $region32: #{tpu_custom_call.1} parent=1 // pred_region
      %v110 = vld [vmem:[#allocation7] sm:$0x3]
      %v111 = vmul.f32 %v110, %v110
      %vm112 = vcmask 254976
      %v113 = vsel %vm112, %v111, 0.0
      %114 = vadd.xlane.f32.xlu0 %v113
      %v115 = vpop.xlane.xlu0 %114
      %v116 = vrsqrt.pop %v115
      %v117 = vmul.f32 %v116, %v115
      %v118 = vmul.f32 %v117, %v116
      %v119 = vmul.f32 0.5, %v118
      %v120 = vsub.f32 1.5, %v119
      %v121 = vmul.f32 %v116, %v120
      %v122 = vmul.f32 %v115, %v121
      %vm123 = vcmp.eq.f32.partialorder %v115, inf
      %v124 = vsel %vm123, %v115, %v122
      %vm125 = vcmp.eq.f32.partialorder %v115, 0.0
      %v126 = vand.u32 %v115, 2147483648
      %v127 = vsel %vm125, %v126, %v124
      %vm128 = vcmask 1024
      %v129 = vsel %vm128, %v127, 0.0
      %130 = vadd.xlane.f32.xlu0 %v129
      %v131 = vpop.xlane.xlu0 %130
      %v132 = vrot.slane %v131, 4
      %v133 = vadd.f32 %v131, %v132
      %v134 = vrot.slane %v133, 2
      %v135 = vadd.f32 %v133, %v134
      %v136 = vrot.slane %v135, 1
      %v137 = vadd.f32 %v135, %v136
      %s138 = vtos %v137
      %v139 = vand.u32 2147483647, %v110
      %v140 = vsel %vm112, %v139, 0.0
      %141 = vadd.xlane.f32.xlu0 %v140
      %v142 = vpop.xlane.xlu0 %141
      %v143 = vrot.slane %v142, 4
      %v144 = vadd.f32 %v142, %v143
      %v145 = vrot.slane %v144, 2
      %v146 = vadd.f32 %v144, %v145
      %v147 = vrot.slane %v146, 1
      %v148 = vadd.f32 %v146, %v147
      %s149 = vtos %v148
      %v150 = vlaneseq
      %v151 = vshrl.u32 %v150, 7
      %v152 = vlaneseq
      %v153 = vand.u32 %v152, 127
      %vm154 = vcmp.eq.s32.totalorder %v151, 0
      %vm155 = vcmp.eq.s32.totalorder %v153, 0
      %vm156 = vmand %vm154, %vm155
      %v157 = vstv %s138
      %v158 = vsel %vm156, %v157, 0.0
      %vm159 = vcmp.eq.s32.totalorder %v153, 1
      %vm160 = vmand %vm154, %vm159
      %v161 = vstv %s149
      %v162 = vsel %vm160, %v161, 0.0
      %v163 = vadd.f32 %v158, %v162
      %164 = vst [vmem:[#allocation9] sm:$0xff] %v163
    $region33: #{tpu_custom_call.1} parent=1 // pred_fallthru
      _
    // Predicated region
    $region34: #{tpu_custom_call.1} parent=1 // pred_check
      _
    $region35: #{tpu_custom_call.1} parent=1 // pred_check_branch
      %166 = sbr.rel (0) target = $region37
    $region36: #{tpu_custom_call.1} parent=1 // pred_region
      %168 = vsyncadd [#allocation4], 0
      %s170 = sshll.u32 [#allocation8], 4
      %s171 = int_to_ptr.vmem [resolvable:$true] %s170
      %s172 = sshll.u32 %s3, 4
      %s173 = int_to_ptr.hbm [resolvable:$true] %s172
      %175 = dma.vmem_to_hbm [thread:$0]  %s171, 128, %s173, [#allocation4]
    $region37: #{tpu_custom_call.1} parent=1 // pred_fallthru
      _
    // Predicated region
    $region38: #{tpu_custom_call.1} parent=1 // pred_check
      _
    $region39: #{tpu_custom_call.1} parent=1 // pred_check_branch
      %177 = sbr.rel (0) target = $region41
    $region40: #{tpu_custom_call.1} parent=1 // pred_region
      %179 = vsyncadd [#allocation10], 0
      %s181 = sshll.u32 [#allocation9], 4
      %s182 = int_to_ptr.vmem [resolvable:$true] %s181
      %s183 = sshll.u32 %s4, 4
      %s184 = int_to_ptr.hbm [resolvable:$true] %s183
      %186 = dma.vmem_to_hbm [thread:$0]  %s182, 128, %s184, [#allocation10]
    $region41: #{tpu_custom_call.1} parent=1 // pred_fallthru
      _
    // Predicated region
    $region42: #{tpu_custom_call.1} parent=1 // pred_check
      _
    $region43: #{tpu_custom_call.1} parent=1 // pred_check_branch
      %188 = sbr.rel (0) target = $region45
    $region44: #{tpu_custom_call.1} parent=1 // pred_region
      %190 = dma.done [#allocation4], 128
    $region45: #{tpu_custom_call.1} parent=1 // pred_fallthru
      _
    // Predicated region
    $region46: #{tpu_custom_call.1} parent=1 // pred_check
      _
    $region47: #{tpu_custom_call.1} parent=1 // pred_check_branch
      %192 = sbr.rel (0) target = $region49
    $region48: #{tpu_custom_call.1} parent=1 // pred_region
      %194 = dma.done [#allocation10], 128
    $region49: #{tpu_custom_call.1} parent=1 // pred_fallthru
      _
    %195 = vsyncpa [#allocation3], 1
    %196 = vsyncpa [#allocation6], 1
    %197 = vsyncpa [#allocation4], 1
    %198 = vsyncpa [#allocation10], 1

</llo_original>
